<compile_context>
chip_gen: v6e
topology: v6e:2x2x1
jax: 0.10.0
libtpu: 0.0.40
codegen_flags: <defaults>
</compile_context>

<pallas_src>
import functools

import jax
import jax.numpy as jnp
from jax.experimental import pallas as pl
from jax.experimental.pallas import tpu as pltpu


def _round_up(x, m):
    return (x + m - 1) // m * m


def _align_con_loss_kernel(e1_ref, c_hat_ref, out_ref, *,
                           inv_temperature, real_b, rows_padded):
    j = pl.program_id(0)
    tn = e1_ref.shape[0]

    # --- normalize the (TN, D) anchor tile in f32, fold in 1/temperature ----------
    # Per-vector eps clamp; PyTorch clamps the product ||a||*||c|| instead --
    # only observable when a norm is ~0.
    a = e1_ref[...].astype(jnp.float32)                          # (TN, D_pad)
    a_inv = jax.lax.rsqrt(
        jnp.maximum(jnp.sum(a * a, axis=-1, keepdims=True), jnp.float32(1e-16)))
    a_hat = a * (a_inv * jnp.float32(inv_temperature))           # (TN, D_pad), f32

    # --- logits slab on the MXU: logits[i, t] = S[i, j*TN + t] / temperature ------
    c_hat = c_hat_ref[...]                                       # (B_row_pad, D_pad)
    logits = jax.lax.dot_general(
        c_hat, a_hat.astype(c_hat.dtype),
        (((1,), (1,)), ((), ())),
        preferred_element_type=jnp.float32)                      # (B_row_pad, TN)

    rows = logits.shape[0]
    if rows_padded:
        # only emitted (trace-time) when contrast rows were actually zero-padded
        row_ids = jax.lax.broadcasted_iota(jnp.int32, (rows, 1), 0)
        logits = logits + jnp.where(row_ids < real_b,
                                    jnp.float32(0.0), jnp.float32(-1e30))

    # column log-sum-exp (softmax over contrast axis 0; columns independent => tiling safe)
    col_max = jnp.max(logits, axis=0, keepdims=True)             # (1, TN)
    lse = col_max + jnp.log(
        jnp.sum(jnp.exp(logits - col_max), axis=0, keepdims=True))

    # --- diagonal pulled straight out of the logits slab (bit-identical to the LSE
    # entries; no extra (TN, D) load stream, no VPU re-dot, no XLU row reduce over D).
    # TODO(synk): a dynamic (TN, TN) row-slice of the slab would make this O(TN^2);
    # Mosaic cannot dynamically slice a *value*, so use a masked column-max instead
    # (compare/select hide under the exp/EUP work already done on the slab).
    start = j * tn
    row2 = jax.lax.broadcasted_iota(jnp.int32, logits.shape, 0)
    col2 = jax.lax.broadcasted_iota(jnp.int32, logits.shape, 1)
    diag = jnp.max(jnp.where(row2 == col2 + start, logits, jnp.float32(-1e30)),
                   axis=0, keepdims=True)                        # (1, TN)

    # per-column -log p(diag); padded columns are dropped by the wrapper
    out_ref[...] = lse - diag


def align_con_loss(encoder_embedding1, encoder_embedding2, temperature=1.0, *,
                   tile_n=256):
    """Pallas implementation of AlignConLoss.forward (contrastive_lambda is unused there)."""
    assert tile_n % 128 == 0
    B, D = encoder_embedding2.shape
    assert encoder_embedding1.shape == (B, D)

    in_dtype = encoder_embedding1.dtype
    # keep bf16 operands bf16 on the MXU; f32 operands stay f32 for accuracy.
    # TODO(synk): accuracy-gated option — cast f32 operands to bf16 for multi-x MXU
    # throughput (validate against _reference first).
    mm_dtype = jnp.bfloat16 if in_dtype == jnp.bfloat16 else jnp.float32

    d_pad = _round_up(D, 128)
    sublane = 16 if mm_dtype == jnp.bfloat16 else 8
    b_row_pad = _round_up(B, sublane)       # contrast rows: sublane padding only
    b_col_pad = _round_up(B, tile_n)        # anchor columns: tile padding
    num_tiles = b_col_pad // tile_n

    # normalize the contrast ONCE in the wrapper -> single VMEM-resident copy in-kernel
    c = encoder_embedding2.astype(jnp.float32)
    c_inv = jax.lax.rsqrt(
        jnp.maximum(jnp.sum(c * c, axis=-1, keepdims=True), jnp.float32(1e-16)))
    c_hat_p = jnp.pad((c * c_inv).astype(mm_dtype),
                      ((0, b_row_pad - B), (0, d_pad - D)))

    # zero padding: padded features add 0 to norms/dots; padded rows/columns are
    # handled by the in-kernel row bias and the wrapper-side slice below.
    e1p = jnp.pad(encoder_embedding1, ((0, b_col_pad - B), (0, d_pad - D)))

    kernel = functools.partial(
        _align_con_loss_kernel,
        inv_temperature=1.0 / float(temperature),
        real_b=B,
        rows_padded=(b_row_pad != B),
    )

    # generation-aware VMEM budget (conservative: assumes 2 contrast buffers)
    in_itemsize = jnp.dtype(e1p.dtype).itemsize
    mm_itemsize = jnp.dtype(mm_dtype).itemsize
    vmem_est = (2 * b_row_pad * d_pad * mm_itemsize   # resident normalized contrast
                + 2 * tile_n * d_pad * in_itemsize    # anchor tile double buffer
                + 4 * b_row_pad * tile_n * 4          # logits / exp / mask temporaries
                + 2 * tile_n * 4)                     # output block
    try:
        vmem_cap = int(pltpu.get_tpu_info().vmem_capacity_bytes)
    except Exception:  # pragma: no cover - conservative default (v7x physical VMEM)
        vmem_cap = 64 * 2 ** 20
    vmem_limit = int(min(int(0.8 * vmem_cap), max(2 * vmem_est, 16 * 2 ** 20)))

    # TODO(synk): when b_row_pad * d_pad * mm_itemsize approaches ~1/3 of vmem_cap
    # (hit first on v7x, 64 MiB/TC), switch to a row-tiled online-LSE (flash-style)
    # variant instead of the resident-contrast design.

    def build(contrast_spec):
        return pl.pallas_call(
            kernel,
            out_shape=jax.ShapeDtypeStruct((1, b_col_pad), jnp.float32),
            grid=(num_tiles,),
            in_specs=[
                pl.BlockSpec((tile_n, d_pad), lambda j: (j, 0)),   # anchor column tile
                contrast_spec,                                      # resident contrast
            ],
            out_specs=pl.BlockSpec((1, tile_n), lambda j: (0, j)),
            compiler_params=pltpu.CompilerParams(
                # column tiles are fully independent (softmax is per column) ->
                # "parallel" shards them across both TensorCores on v7x.
                dimension_semantics=("parallel",),
                vmem_limit_bytes=vmem_limit,
            ),
        )

    # Preferred: single-buffered resident contrast (no constant-index double buffer).
    # Fall back to the default blocked spec if this jax/backend rejects Buffered(1).
    specs = []
    try:
        specs.append(pl.BlockSpec((b_row_pad, d_pad), lambda j: (0, 0),
                                  pipeline_mode=pl.Buffered(1)))
    except Exception:  # pragma: no cover - pipeline_mode kwarg unavailable
        pass
    specs.append(pl.BlockSpec((b_row_pad, d_pad), lambda j: (0, 0)))

    partials, err = None, None
    for idx, spec in enumerate(specs):
        try:
            partials = build(spec)(e1p, c_hat_p)
            if idx + 1 < len(specs):
                # speculative path: force compile/run before accepting it
                jax.block_until_ready(partials)
            break
        except Exception as e:  # pragma: no cover - fallback path
            partials, err = None, e
    if partials is None:
        raise err

    # drop padded anchor columns, rescale by temperature
    return jnp.sum(partials[0, :B]) * jnp.float32(temperature)


def _reference(e1, e2, temperature=1.0):
    """Pure-JAX reference mirroring the PyTorch forward exactly."""
    eps = 1e-8
    a = e1.astype(jnp.float32)
    c = e2.astype(jnp.float32)
    an = jnp.sqrt(jnp.sum(a * a, axis=-1))
    cn = jnp.sqrt(jnp.sum(c * c, axis=-1))
    dots = c @ a.T                                   # [i, k] = c[i] . a[k]
    denom = jnp.maximum(cn[:, None] * an[None, :], eps)
    logits = dots / denom / temperature
    logp = jax.nn.log_softmax(logits, axis=0)
    return -jnp.sum(jnp.diag(logp)) * temperature


if __name__ == "__main__":
    key = jax.random.PRNGKey(0)
    k1, k2 = jax.random.split(key)
    B, D = 8, 32
    e1 = jax.random.normal(k1, (B, D), dtype=jnp.float32)
    e2 = jax.random.normal(k2, (B, D), dtype=jnp.float32)
    temperature = 0.5  # AlignConLoss(contrastive_lambda=0.0, temperature=0.5)

    loss = align_con_loss(e1, e2, temperature)
    jax.block_until_ready(loss)

    ref = _reference(e1, e2, temperature)
    assert jnp.allclose(loss, ref, atol=1e-3, rtol=1e-3), (loss, ref)
    print("KERNEL_OK")
</pallas_src>

<mosaic_0001>
module attributes {stable_mosaic.version = 11 : i64} {
  func.func @_align_con_loss_kernel(%arg0: i32, %arg1: memref<256x128xf32, #tpu.memory_space<vmem>>, %arg2: memref<8x128xf32, #tpu.memory_space<vmem>>, %arg3: memref<1x256xf32, #tpu.memory_space<vmem>>) attributes {dimension_semantics = [#tpu.dimension_semantics<parallel>], iteration_bounds = array<i64: 1>, scalar_prefetch = 0 : i64, scratch_operands = 0 : i64, tpu.core_type = #tpu.core_type<tc>, window_params = [{transform_indices = @transform_0, window_bounds = array<i64: 256, 128>}, {pipeline_mode = #tpu.pipeline_mode<synchronous>, transform_indices = @transform_1, window_bounds = array<i64: 8, 128>}, {transform_indices = @transform_2, window_bounds = array<i64: 1, 256>}]} {
    %c0 = arith.constant 0 : index
    %c0_0 = arith.constant 0 : index
    %0 = vector.load %arg1[%c0, %c0_0] : memref<256x128xf32, #tpu.memory_space<vmem>>, vector<256x128xf32>
    %1 = arith.mulf %0, %0 : vector<256x128xf32>
    %cst = arith.constant dense<0.000000e+00> : vector<256xf32>
    %2 = vector.multi_reduction <add>, %1, %cst [1] : vector<256x128xf32> to vector<256xf32>
    %3 = vector.shape_cast %2 : vector<256xf32> to vector<256x1xf32>
    %cst_1 = arith.constant 1.000000e-16 : f32
    %4 = vector.broadcast %cst_1 : f32 to vector<256x1xf32>
    %5 = arith.maximumf %3, %4 : vector<256x1xf32>
    %6 = math.rsqrt %5 : vector<256x1xf32>
    %cst_2 = arith.constant 2.000000e+00 : f32
    %7 = vector.broadcast %cst_2 : f32 to vector<256x1xf32>
    %8 = arith.mulf %6, %7 : vector<256x1xf32>
    %9 = vector.broadcast %8 : vector<256x1xf32> to vector<256x128xf32>
    %10 = arith.mulf %0, %9 : vector<256x128xf32>
    %c0_3 = arith.constant 0 : index
    %c0_4 = arith.constant 0 : index
    %11 = vector.load %arg2[%c0_3, %c0_4] : memref<8x128xf32, #tpu.memory_space<vmem>>, vector<8x128xf32>
    %cst_5 = arith.constant dense<0.000000e+00> : vector<8x256xf32>
    %12 = tpu.matmul %11, %10, %cst_5 {dimension_numbers = #tpu.dot_dimension_numbers<[1], [1], [0], [0], [0, 0, 1, 0], [], []>} : vector<8x128xf32>, vector<256x128xf32>, vector<8x256xf32> -> vector<8x256xf32>
    %cst_6 = arith.constant dense<0xFF800000> : vector<256xf32>
    %13 = vector.multi_reduction <maximumf>, %12, %cst_6 [0] : vector<8x256xf32> to vector<256xf32>
    %14 = vector.shape_cast %13 : vector<256xf32> to vector<1x256xf32>
    %15 = vector.broadcast %14 : vector<1x256xf32> to vector<8x256xf32>
    %16 = arith.subf %12, %15 : vector<8x256xf32>
    %17 = math.exp %16 : vector<8x256xf32>
    %cst_7 = arith.constant dense<0.000000e+00> : vector<256xf32>
    %18 = vector.multi_reduction <add>, %17, %cst_7 [0] : vector<8x256xf32> to vector<256xf32>
    %19 = vector.shape_cast %18 : vector<256xf32> to vector<1x256xf32>
    %20 = math.log %19 : vector<1x256xf32>
    %21 = arith.addf %14, %20 : vector<1x256xf32>
    %c256_i32 = arith.constant 256 : i32
    %22 = arith.muli %arg0, %c256_i32 : i32
    %23 = tpu.iota {dimensions = array<i32: 0>} : vector<8x256xi32>
    %24 = tpu.iota {dimensions = array<i32: 1>} : vector<8x256xi32>
    %25 = vector.broadcast %22 : i32 to vector<8x256xi32>
    %26 = arith.addi %24, %25 : vector<8x256xi32>
    %27 = arith.cmpi eq, %23, %26 : vector<8x256xi32>
    %cst_8 = arith.constant -1.000000e+30 : f32
    %28 = vector.broadcast %cst_8 : f32 to vector<8x256xf32>
    %29 = arith.select %27, %12, %28 : vector<8x256xi1>, vector<8x256xf32>
    %cst_9 = arith.constant dense<0xFF800000> : vector<256xf32>
    %30 = vector.multi_reduction <maximumf>, %29, %cst_9 [0] : vector<8x256xf32> to vector<256xf32>
    %31 = vector.shape_cast %30 : vector<256xf32> to vector<1x256xf32>
    %32 = arith.subf %21, %31 : vector<1x256xf32>
    %c0_10 = arith.constant 0 : index
    %c0_11 = arith.constant 0 : index
    %33 = vector.load %arg3[%c0_10, %c0_11] : memref<1x256xf32, #tpu.memory_space<vmem>>, vector<1x256xf32>
    tpu.vector_store %arg3[%c0_10, %c0_11], %32 {strides = array<i32>} : memref<1x256xf32, #tpu.memory_space<vmem>>, vector<1x256xf32>,
    return
  }
  func.func @transform_0(%arg0: i32) -> (i32, i32) {
    %c0_i32 = arith.constant 0 : i32
    %c0_i32_0 = arith.constant 0 : i32
    return %arg0, %c0_i32 : i32, i32
  }
  func.func @transform_1(%arg0: i32) -> (i32, i32) {
    %c0_i32 = arith.constant 0 : i32
    %c0_i32_0 = arith.constant 0 : i32
    %c0_i32_1 = arith.constant 0 : i32
    return %c0_i32, %c0_i32_0 : i32, i32
  }
  func.func @transform_2(%arg0: i32) -> (i32, i32) {
    %c0_i32 = arith.constant 0 : i32
    %c0_i32_0 = arith.constant 0 : i32
    return %c0_i32, %arg0 : i32, i32
  }
}

module attributes {stable_mosaic.version = 11 : i64} {
  func.func @_align_con_loss_kernel(%arg0: i32, %arg1: memref<256x128xf32, #tpu.memory_space<vmem>>, %arg2: memref<8x128xf32, #tpu.memory_space<vmem>>, %arg3: memref<1x256xf32, #tpu.memory_space<vmem>>) attributes {dimension_semantics = [#tpu.dimension_semantics<parallel>], iteration_bounds = array<i64: 1>, scalar_prefetch = 0 : i64, scratch_operands = 0 : i64, tpu.core_type = #tpu.core_type<tc>, window_params = [{transform_indices = @transform_0, window_bounds = array<i64: 256, 128>}, {pipeline_mode = #tpu.pipeline_mode<synchronous>, transform_indices = @transform_1, window_bounds = array<i64: 8, 128>}, {transform_indices = @transform_2, window_bounds = array<i64: 1, 256>}]} {
    %c0 = arith.constant 0 : index
    %c0_0 = arith.constant 0 : index
    %0 = vector.load %arg1[%c0, %c0_0] : memref<256x128xf32, #tpu.memory_space<vmem>>, vector<256x128xf32>
    %1 = arith.mulf %0, %0 : vector<256x128xf32>
    %cst = arith.constant dense<0.000000e+00> : vector<256xf32>
    %2 = vector.multi_reduction <add>, %1, %cst [1] : vector<256x128xf32> to vector<256xf32>
    %3 = vector.shape_cast %2 : vector<256xf32> to vector<256x1xf32>
    %cst_1 = arith.constant 1.000000e-16 : f32
    %4 = vector.broadcast %cst_1 : f32 to vector<256x1xf32>
    %5 = arith.maximumf %3, %4 : vector<256x1xf32>
    %6 = math.rsqrt %5 : vector<256x1xf32>
    %cst_2 = arith.constant 2.000000e+00 : f32
    %7 = vector.broadcast %cst_2 : f32 to vector<256x1xf32>
    %8 = arith.mulf %6, %7 : vector<256x1xf32>
    %9 = vector.broadcast %8 : vector<256x1xf32> to vector<256x128xf32>
    %10 = arith.mulf %0, %9 : vector<256x128xf32>
    %c0_3 = arith.constant 0 : index
    %c0_4 = arith.constant 0 : index
    %11 = vector.load %arg2[%c0_3, %c0_4] : memref<8x128xf32, #tpu.memory_space<vmem>>, vector<8x128xf32>
    %cst_5 = arith.constant dense<0.000000e+00> : vector<8x256xf32>
    %12 = tpu.matmul %11, %10, %cst_5 {dimension_numbers = #tpu.dot_dimension_numbers<[1], [1], [0], [0], [0, 0, 1, 0], [], []>} : vector<8x128xf32>, vector<256x128xf32>, vector<8x256xf32> -> vector<8x256xf32>
    %cst_6 = arith.constant dense<0xFF800000> : vector<256xf32>
    %13 = vector.multi_reduction <maximumf>, %12, %cst_6 [0] : vector<8x256xf32> to vector<256xf32>
    %14 = vector.shape_cast %13 : vector<256xf32> to vector<1x256xf32>
    %15 = vector.broadcast %14 : vector<1x256xf32> to vector<8x256xf32>
    %16 = arith.subf %12, %15 : vector<8x256xf32>
    %17 = math.exp %16 : vector<8x256xf32>
    %cst_7 = arith.constant dense<0.000000e+00> : vector<256xf32>
    %18 = vector.multi_reduction <add>, %17, %cst_7 [0] : vector<8x256xf32> to vector<256xf32>
    %19 = vector.shape_cast %18 : vector<256xf32> to vector<1x256xf32>
    %20 = math.log %19 : vector<1x256xf32>
    %21 = arith.addf %14, %20 : vector<1x256xf32>
    %c256_i32 = arith.constant 256 : i32
    %22 = arith.muli %arg0, %c256_i32 : i32
    %23 = tpu.iota {dimensions = array<i32: 0>} : vector<8x256xi32>
    %24 = tpu.iota {dimensions = array<i32: 1>} : vector<8x256xi32>
    %25 = vector.broadcast %22 : i32 to vector<8x256xi32>
    %26 = arith.addi %24, %25 : vector<8x256xi32>
    %27 = arith.cmpi eq, %23, %26 : vector<8x256xi32>
    %cst_8 = arith.constant -1.000000e+30 : f32
    %28 = vector.broadcast %cst_8 : f32 to vector<8x256xf32>
    %29 = arith.select %27, %12, %28 : vector<8x256xi1>, vector<8x256xf32>
    %cst_9 = arith.constant dense<0xFF800000> : vector<256xf32>
    %30 = vector.multi_reduction <maximumf>, %29, %cst_9 [0] : vector<8x256xf32> to vector<256xf32>
    %31 = vector.shape_cast %30 : vector<256xf32> to vector<1x256xf32>
    %32 = arith.subf %21, %31 : vector<1x256xf32>
    %c0_10 = arith.constant 0 : index
    %c0_11 = arith.constant 0 : index
    %33 = vector.load %arg3[%c0_10, %c0_11] : memref<1x256xf32, #tpu.memory_space<vmem>>, vector<1x256xf32>
    tpu.vector_store %arg3[%c0_10, %c0_11], %32 {strides = array<i32>} : memref<1x256xf32, #tpu.memory_space<vmem>>, vector<1x256xf32>,
    return
  }
  func.func @transform_0(%arg0: i32) -> (i32, i32) {
    %c0_i32 = arith.constant 0 : i32
    %c0_i32_0 = arith.constant 0 : i32
    return %arg0, %c0_i32 : i32, i32
  }
  func.func @transform_1(%arg0: i32) -> (i32, i32) {
    %c0_i32 = arith.constant 0 : i32
    %c0_i32_0 = arith.constant 0 : i32
    %c0_i32_1 = arith.constant 0 : i32
    return %c0_i32, %c0_i32_0 : i32, i32
  }
  func.func @transform_2(%arg0: i32) -> (i32, i32) {
    %c0_i32 = arith.constant 0 : i32
    %c0_i32_0 = arith.constant 0 : i32
    return %c0_i32, %arg0 : i32, i32
  }
}

</mosaic_0001>

<llo_original>
// kernel: tpu_custom_call.1
$region0: #{tpu_custom_call.1}
  #allocation0 [shape = 'u32[]', space=smem, size = 0x4, offset = 0x4, fixed_abs, tag = 'smem constant byte address 0x4 - core index']
  #allocation1 [shape = 'u32[144,128]{1,0:T(1,128)}', space=vmem, size = 0x12000, scoped, tag = 'internal scratch']
  %s0 = inlined_call_operand.hbm [shape: f32[256,128], index: 0, kind: input, shape index: {}]
  %s1 = inlined_call_operand.hbm [shape: f32[8,128], index: 1, kind: input, shape index: {}]
  %s2 = inlined_call_operand.hbm [shape: f32[1,256], index: 2, kind: output, shape index: {}]
  %s3 = sld [smem:[#allocation0]]
  $region26: #{tpu_custom_call.1} parent=0
    _
  %s5 = ssub.s32 1, %s3
  %s6 = scalar_select 0, %s5, %s3
  $region1: #{tpu_custom_call.1} parent=0
    #allocation2 [shape = 'u8[131072]{0}', space=vmem, size = 0x20000, scoped, tag = 'input window, operand 0, single buffered']
    #allocation3 [shape = 's32[1]{0}', space=sflag, size = 0x4, scoped, tag = 'scoped memory for tpu_custom_call.1']
    #allocation4 [shape = 's32[1]{0}', space=sflag, size = 0x4, scoped, tag = 'scoped memory for tpu_custom_call.1']
    #allocation5 [shape = 'u8[4096]{0}', space=vmem, size = 0x1000, scoped, tag = 'input window, operand 1, single buffered']
    #allocation6 [shape = 's32[1]{0}', space=sflag, size = 0x4, scoped, tag = 'scoped memory for tpu_custom_call.1']
    #allocation7 [shape = 'u8[1024]{0}', space=vmem, size = 0x400, scoped, tag = 'output window, operand 0, single buffered']
    %7 = vsyncpa [#allocation3], 0
    %8 = vsyncpa [#allocation6], 0
    %9 = vsyncpa [#allocation4], 0
    // Predicated region
    $region2: #{tpu_custom_call.1} parent=1 // pred_check
      _
    $region3: #{tpu_custom_call.1} parent=1 // pred_check_branch
      %11 = sbr.rel (0) target = $region5
    $region4: #{tpu_custom_call.1} parent=1 // pred_region
      %s13 = ssub.s32 4096, 4096
      %14 = vsyncadd [#allocation3], %s13
      %s15 = sshll.u32 [#allocation2], 4
      %s16 = int_to_ptr.vmem [resolvable:$true] %s15
      %21 = dma.hbm_to_vmem [thread:$0]  %s0, 4096, %s16, [#allocation3], 128, 128, 8
    $region5: #{tpu_custom_call.1} parent=1 // pred_fallthru
      _
    // Predicated region
    $region6: #{tpu_custom_call.1} parent=1 // pred_check
      _
    $region7: #{tpu_custom_call.1} parent=1 // pred_check_branch
      %23 = sbr.rel (0) target = $region9
    $region8: #{tpu_custom_call.1} parent=1 // pred_region
      %s25 = ssub.s32 128, 128
      %26 = vsyncadd [#allocation6], %s25
      %s28 = sshll.u32 [#allocation5], 4
      %s29 = int_to_ptr.vmem [resolvable:$true] %s28
      %31 = dma.hbm_to_vmem [thread:$0]  %s1, 128, %s29, [#allocation6]
    $region9: #{tpu_custom_call.1} parent=1 // pred_fallthru
      _
    // Predicated region
    $region10: #{tpu_custom_call.1} parent=1 // pred_check
      _
    $region11: #{tpu_custom_call.1} parent=1 // pred_check_branch
      %33 = sbr.rel (0) target = $region13
    $region12: #{tpu_custom_call.1} parent=1 // pred_region
      %34 = dma.done [#allocation3], 4096
    $region13: #{tpu_custom_call.1} parent=1 // pred_fallthru
      _
    // Predicated region
    $region14: #{tpu_custom_call.1} parent=1 // pred_check
      _
    $region15: #{tpu_custom_call.1} parent=1 // pred_check_branch
      %36 = sbr.rel (0) target = $region17
    $region16: #{tpu_custom_call.1} parent=1 // pred_region
      %37 = dma.done [#allocation6], 128
    $region17: #{tpu_custom_call.1} parent=1 // pred_fallthru
      _
    %v38 = vld [vmem:[#allocation2] sm:$0xff]
    %v39 = vld [vmem:[#allocation2 + $0x8] sm:$0xff]
    %v40 = vld [vmem:[#allocation2 + $0x10] sm:$0xff]
    %v41 = vld [vmem:[#allocation2 + $0x18] sm:$0xff]
    %v42 = vld [vmem:[#allocation2 + $0x20] sm:$0xff]
    %v43 = vld [vmem:[#allocation2 + $0x28] sm:$0xff]
    %v44 = vld [vmem:[#allocation2 + $0x30] sm:$0xff]
    %v45 = vld [vmem:[#allocation2 + $0x38] sm:$0xff]
    %v46 = vld [vmem:[#allocation2 + $0x40] sm:$0xff]
    %v47 = vld [vmem:[#allocation2 + $0x48] sm:$0xff]
    %v48 = vld [vmem:[#allocation2 + $0x50] sm:$0xff]
    %v49 = vld [vmem:[#allocation2 + $0x58] sm:$0xff]
    %v50 = vld [vmem:[#allocation2 + $0x60] sm:$0xff]
    %v51 = vld [vmem:[#allocation2 + $0x68] sm:$0xff]
    %v52 = vld [vmem:[#allocation2 + $0x70] sm:$0xff]
    %v53 = vld [vmem:[#allocation2 + $0x78] sm:$0xff]
    %v54 = vld [vmem:[#allocation2 + $0x80] sm:$0xff]
    %v55 = vld [vmem:[#allocation2 + $0x88] sm:$0xff]
    %v56 = vld [vmem:[#allocation2 + $0x90] sm:$0xff]
    %v57 = vld [vmem:[#allocation2 + $0x98] sm:$0xff]
    %v58 = vld [vmem:[#allocation2 + $0xa0] sm:$0xff]
    %v59 = vld [vmem:[#allocation2 + $0xa8] sm:$0xff]
    %v60 = vld [vmem:[#allocation2 + $0xb0] sm:$0xff]
    %v61 = vld [vmem:[#allocation2 + $0xb8] sm:$0xff]
    %v62 = vld [vmem:[#allocation2 + $0xc0] sm:$0xff]
    %v63 = vld [vmem:[#allocation2 + $0xc8] sm:$0xff]
    %v64 = vld [vmem:[#allocation2 + $0xd0] sm:$0xff]
    %v65 = vld [vmem:[#allocation2 + $0xd8] sm:$0xff]
    %v66 = vld [vmem:[#allocation2 + $0xe0] sm:$0xff]
    %v67 = vld [vmem:[#allocation2 + $0xe8] sm:$0xff]
    %v68 = vld [vmem:[#allocation2 + $0xf0] sm:$0xff]
    %v69 = vld [vmem:[#allocation2 + $0xf8] sm:$0xff]
    %v70 = vmul.f32 %v38, %v38
    %v71 = vmul.f32 %v39, %v39
    %v72 = vmul.f32 %v40, %v40
    %v73 = vmul.f32 %v41, %v41
    %v74 = vmul.f32 %v42, %v42
    %v75 = vmul.f32 %v43, %v43
    %v76 = vmul.f32 %v44, %v44
    %v77 = vmul.f32 %v45, %v45
    %v78 = vmul.f32 %v46, %v46
    %v79 = vmul.f32 %v47, %v47
    %v80 = vmul.f32 %v48, %v48
    %v81 = vmul.f32 %v49, %v49
    %v82 = vmul.f32 %v50, %v50
    %v83 = vmul.f32 %v51, %v51
    %v84 = vmul.f32 %v52, %v52
    %v85 = vmul.f32 %v53, %v53
    %v86 = vmul.f32 %v54, %v54
    %v87 = vmul.f32 %v55, %v55
    %v88 = vmul.f32 %v56, %v56
    %v89 = vmul.f32 %v57, %v57
    %v90 = vmul.f32 %v58, %v58
    %v91 = vmul.f32 %v59, %v59
    %v92 = vmul.f32 %v60, %v60
    %v93 = vmul.f32 %v61, %v61
    %v94 = vmul.f32 %v62, %v62
    %v95 = vmul.f32 %v63, %v63
    %v96 = vmul.f32 %v64, %v64
    %v97 = vmul.f32 %v65, %v65
    %v98 = vmul.f32 %v66, %v66
    %v99 = vmul.f32 %v67, %v67
    %v100 = vmul.f32 %v68, %v68
    %v101 = vmul.f32 %v69, %v69
    %102 = vadd.xlane.f32.xlu0 %v70
    %v103 = vpop.xlane.xlu0 %102
    %104 = vadd.xlane.f32.xlu0 %v71
    %v105 = vpop.xlane.xlu0 %104
    %106 = vadd.xlane.f32.xlu0 %v72
    %v107 = vpop.xlane.xlu0 %106
    %108 = vadd.xlane.f32.xlu0 %v73
    %v109 = vpop.xlane.xlu0 %108
    %110 = vadd.xlane.f32.xlu0 %v74
    %v111 = vpop.xlane.xlu0 %110
    %112 = vadd.xlane.f32.xlu0 %v75
    %v113 = vpop.xlane.xlu0 %112
    %114 = vadd.xlane.f32.xlu0 %v76
    %v115 = vpop.xlane.xlu0 %114
    %116 = vadd.xlane.f32.xlu0 %v77
    %v117 = vpop.xlane.xlu0 %116
    %118 = vadd.xlane.f32.xlu0 %v78
    %v119 = vpop.xlane.xlu0 %118
    %120 = vadd.xlane.f32.xlu0 %v79
    %v121 = vpop.xlane.xlu0 %120
    %122 = vadd.xlane.f32.xlu0 %v80
    %v123 = vpop.xlane.xlu0 %122
    %124 = vadd.xlane.f32.xlu0 %v81
    %v125 = vpop.xlane.xlu0 %124
    %126 = vadd.xlane.f32.xlu0 %v82
    %v127 = vpop.xlane.xlu0 %126
    %128 = vadd.xlane.f32.xlu0 %v83
    %v129 = vpop.xlane.xlu0 %128
    %130 = vadd.xlane.f32.xlu0 %v84
    %v131 = vpop.xlane.xlu0 %130
    %132 = vadd.xlane.f32.xlu0 %v85
    %v133 = vpop.xlane.xlu0 %132
    %134 = vadd.xlane.f32.xlu0 %v86
    %v135 = vpop.xlane.xlu0 %134
    %136 = vadd.xlane.f32.xlu0 %v87
    %v137 = vpop.xlane.xlu0 %136
    %138 = vadd.xlane.f32.xlu0 %v88
    %v139 = vpop.xlane.xlu0 %138
    %140 = vadd.xlane.f32.xlu0 %v89
    %v141 = vpop.xlane.xlu0 %140
    %142 = vadd.xlane.f32.xlu0 %v90
    %v143 = vpop.xlane.xlu0 %142
    %144 = vadd.xlane.f32.xlu0 %v91
    %v145 = vpop.xlane.xlu0 %144
    %146 = vadd.xlane.f32.xlu0 %v92
    %v147 = vpop.xlane.xlu0 %146
    %148 = vadd.xlane.f32.xlu0 %v93
    %v149 = vpop.xlane.xlu0 %148
    %150 = vadd.xlane.f32.xlu0 %v94
    %v151 = vpop.xlane.xlu0 %150
    %152 = vadd.xlane.f32.xlu0 %v95
    %v153 = vpop.xlane.xlu0 %152
    %154 = vadd.xlane.f32.xlu0 %v96
    %v155 = vpop.xlane.xlu0 %154
    %156 = vadd.xlane.f32.xlu0 %v97
    %v157 = vpop.xlane.xlu0 %156
    %158 = vadd.xlane.f32.xlu0 %v98
    %v159 = vpop.xlane.xlu0 %158
    %160 = vadd.xlane.f32.xlu0 %v99
    %v161 = vpop.xlane.xlu0 %160
    %162 = vadd.xlane.f32.xlu0 %v100
    %v163 = vpop.xlane.xlu0 %162
    %164 = vadd.xlane.f32.xlu0 %v101
    %v165 = vpop.xlane.xlu0 %164
    %v166 = vmax.f32 %v103, 1e-16
    %v167 = vmax.f32 %v105, 1e-16
    %v168 = vmax.f32 %v107, 1e-16
    %v169 = vmax.f32 %v109, 1e-16
    %v170 = vmax.f32 %v111, 1e-16
    %v171 = vmax.f32 %v113, 1e-16
    %v172 = vmax.f32 %v115, 1e-16
    %v173 = vmax.f32 %v117, 1e-16
    %v174 = vmax.f32 %v119, 1e-16
    %v175 = vmax.f32 %v121, 1e-16
    %v176 = vmax.f32 %v123, 1e-16
    %v177 = vmax.f32 %v125, 1e-16
    %v178 = vmax.f32 %v127, 1e-16
    %v179 = vmax.f32 %v129, 1e-16
    %v180 = vmax.f32 %v131, 1e-16
    %v181 = vmax.f32 %v133, 1e-16
    %v182 = vmax.f32 %v135, 1e-16
    %v183 = vmax.f32 %v137, 1e-16
    %v184 = vmax.f32 %v139, 1e-16
    %v185 = vmax.f32 %v141, 1e-16
    %v186 = vmax.f32 %v143, 1e-16
    %v187 = vmax.f32 %v145, 1e-16
    %v188 = vmax.f32 %v147, 1e-16
    %v189 = vmax.f32 %v149, 1e-16
    %v190 = vmax.f32 %v151, 1e-16
    %v191 = vmax.f32 %v153, 1e-16
    %v192 = vmax.f32 %v155, 1e-16
    %v193 = vmax.f32 %v157, 1e-16
    %v194 = vmax.f32 %v159, 1e-16
    %v195 = vmax.f32 %v161, 1e-16
    %v196 = vmax.f32 %v163, 1e-16
    %v197 = vmax.f32 %v165, 1e-16
    %v198 = vrsqrt.pop %v166
    %v199 = vrsqrt.pop %v167
    %v200 = vrsqrt.pop %v168
    %v201 = vrsqrt.pop %v169
    %v202 = vrsqrt.pop %v170
    %v203 = vrsqrt.pop %v171
    %v204 = vrsqrt.pop %v172
    %v205 = vrsqrt.pop %v173
    %v206 = vrsqrt.pop %v174
    %v207 = vrsqrt.pop %v175
    %v208 = vrsqrt.pop %v176
    %v209 = vrsqrt.pop %v177
    %v210 = vrsqrt.pop %v178
    %v211 = vrsqrt.pop %v179
    %v212 = vrsqrt.pop %v180
    %v213 = vrsqrt.pop %v181
    %v214 = vrsqrt.pop %v182
    %v215 = vrsqrt.pop %v183
    %v216 = vrsqrt.pop %v184
    %v217 = vrsqrt.pop %v185
    %v218 = vrsqrt.pop %v186
    %v219 = vrsqrt.pop %v187
    %v220 = vrsqrt.pop %v188
    %v221 = vrsqrt.pop %v189
    %v222 = vrsqrt.pop %v190
    %v223 = vrsqrt.pop %v191
    %v224 = vrsqrt.pop %v192
    %v225 = vrsqrt.pop %v193
    %v226 = vrsqrt.pop %v194
    %v227 = vrsqrt.pop %v195
    %v228 = vrsqrt.pop %v196
    %v229 = vrsqrt.pop %v197
    %v230 = vmul.f32 %v198, 2.0
    %v231 = vmul.f32 %v199, 2.0
    %v232 = vmul.f32 %v200, 2.0
    %v233 = vmul.f32 %v201, 2.0
    %v234 = vmul.f32 %v202, 2.0
    %v235 = vmul.f32 %v203, 2.0
    %v236 = vmul.f32 %v204, 2.0
    %v237 = vmul.f32 %v205, 2.0
    %v238 = vmul.f32 %v206, 2.0
    %v239 = vmul.f32 %v207, 2.0
    %v240 = vmul.f32 %v208, 2.0
    %v241 = vmul.f32 %v209, 2.0
    %v242 = vmul.f32 %v210, 2.0
    %v243 = vmul.f32 %v211, 2.0
    %v244 = vmul.f32 %v212, 2.0
    %v245 = vmul.f32 %v213, 2.0
    %v246 = vmul.f32 %v214, 2.0
    %v247 = vmul.f32 %v215, 2.0
    %v248 = vmul.f32 %v216, 2.0
    %v249 = vmul.f32 %v217, 2.0
    %v250 = vmul.f32 %v218, 2.0
    %v251 = vmul.f32 %v219, 2.0
    %v252 = vmul.f32 %v220, 2.0
    %v253 = vmul.f32 %v221, 2.0
    %v254 = vmul.f32 %v222, 2.0
    %v255 = vmul.f32 %v223, 2.0
    %v256 = vmul.f32 %v224, 2.0
    %v257 = vmul.f32 %v225, 2.0
    %v258 = vmul.f32 %v226, 2.0
    %v259 = vmul.f32 %v227, 2.0
    %v260 = vmul.f32 %v228, 2.0
    %v261 = vmul.f32 %v229, 2.0
    %v262 = vmul.f32 %v38, %v230
    %v263 = vmul.f32 %v39, %v231
    %v264 = vmul.f32 %v40, %v232
    %v265 = vmul.f32 %v41, %v233
    %v266 = vmul.f32 %v42, %v234
    %v267 = vmul.f32 %v43, %v235
    %v268 = vmul.f32 %v44, %v236
    %v269 = vmul.f32 %v45, %v237
    %v270 = vmul.f32 %v46, %v238
    %v271 = vmul.f32 %v47, %v239
    %v272 = vmul.f32 %v48, %v240
    %v273 = vmul.f32 %v49, %v241
    %v274 = vmul.f32 %v50, %v242
    %v275 = vmul.f32 %v51, %v243
    %v276 = vmul.f32 %v52, %v244
    %v277 = vmul.f32 %v53, %v245
    %v278 = vmul.f32 %v54, %v246
    %v279 = vmul.f32 %v55, %v247
    %v280 = vmul.f32 %v56, %v248
    %v281 = vmul.f32 %v57, %v249
    %v282 = vmul.f32 %v58, %v250
    %v283 = vmul.f32 %v59, %v251
    %v284 = vmul.f32 %v60, %v252
    %v285 = vmul.f32 %v61, %v253
    %v286 = vmul.f32 %v62, %v254
    %v287 = vmul.f32 %v63, %v255
    %v288 = vmul.f32 %v64, %v256
    %v289 = vmul.f32 %v65, %v257
    %v290 = vmul.f32 %v66, %v258
    %v291 = vmul.f32 %v67, %v259
    %v292 = vmul.f32 %v68, %v260
    %v293 = vmul.f32 %v69, %v261
    %v294 = vld [vmem:[#allocation5] sm:$0xff]
    %295 = vmatprep.subr.mxu0 0.0
    %296 = vmatpush1.xpose.msra.mxu0 %v277
    %297 = vmatprep.subr.mxu0 0.0
    %298 = vmatpush1.xpose.msra.mxu0 %v276
    %299 = vmatprep.subr.mxu0 0.0
    %300 = vmatpush1.xpose.msra.mxu0 %v275
    %301 = vmatprep.subr.mxu0 0.0
    %302 = vmatpush1.xpose.msra.mxu0 %v274
    %303 = vmatprep.subr.mxu0 0.0
    %304 = vmatpush1.xpose.msra.mxu0 %v273
    %305 = vmatprep.subr.mxu0 0.0
    %306 = vmatpush1.xpose.msra.mxu0 %v272
    %307 = vmatprep.subr.mxu0 0.0
    %308 = vmatpush1.xpose.msra.mxu0 %v271
    %309 = vmatprep.subr.mxu0 0.0
    %310 = vmatpush1.xpose.msra.mxu0 %v270
    %311 = vmatprep.subr.mxu0 0.0
    %312 = vmatpush1.xpose.msra.mxu0 %v269
    %313 = vmatprep.subr.mxu0 0.0
    %314 = vmatpush1.xpose.msra.mxu0 %v268
    %315 = vmatprep.subr.mxu0 0.0
    %316 = vmatpush1.xpose.msra.mxu0 %v267
    %317 = vmatprep.subr.mxu0 0.0
    %318 = vmatpush1.xpose.msra.mxu0 %v266
    %319 = vmatprep.subr.mxu0 0.0
    %320 = vmatpush1.xpose.msra.mxu0 %v265
    %321 = vmatprep.subr.mxu0 0.0
    %322 = vmatpush1.xpose.msra.mxu0 %v264
    %323 = vmatprep.subr.mxu0 0.0
    %324 = vmatpush1.xpose.msra.mxu0 %v263
    %325 = vmatprep.subr.mxu0 0.0
    %326 = vmatpush1.xpose.msra.mxu0 %v262
    %327 = vmatprep.subr.mxu0 0.0
    %328 = vmatpush2.xpose.msra.mxu0 %v293
    %329 = vmatprep.subr.mxu0 0.0
    %330 = vmatpush2.xpose.msra.mxu0 %v292
    %331 = vmatprep.subr.mxu0 0.0
    %332 = vmatpush2.xpose.msra.mxu0 %v291
    %333 = vmatprep.subr.mxu0 0.0
    %334 = vmatpush2.xpose.msra.mxu0 %v290
    %335 = vmatprep.subr.mxu0 0.0
    %336 = vmatpush2.xpose.msra.mxu0 %v289
    %337 = vmatprep.subr.mxu0 0.0
    %338 = vmatpush2.xpose.msra.mxu0 %v288
    %339 = vmatprep.subr.mxu0 0.0
    %340 = vmatpush2.xpose.msra.mxu0 %v287
    %341 = vmatprep.subr.mxu0 0.0
    %342 = vmatpush2.xpose.msra.mxu0 %v286
    %343 = vmatprep.subr.mxu0 0.0
    %344 = vmatpush2.xpose.msra.mxu0 %v285
    %345 = vmatprep.subr.mxu0 0.0
    %346 = vmatpush2.xpose.msra.mxu0 %v284
    %347 = vmatprep.subr.mxu0 0.0
    %348 = vmatpush2.xpose.msra.mxu0 %v283
    %349 = vmatprep.subr.mxu0 0.0
    %350 = vmatpush2.xpose.msra.mxu0 %v282
    %351 = vmatprep.subr.mxu0 0.0
    %352 = vmatpush2.xpose.msra.mxu0 %v281
    %353 = vmatprep.subr.mxu0 0.0
    %354 = vmatpush2.xpose.msra.mxu0 %v280
    %355 = vmatprep.subr.mxu0 0.0
    %356 = vmatpush2.xpose.msra.mxu0 %v279
    %357 = vmatprep.subr.mxu0 0.0
    %358 = vmatpush2.xpose.msra.mxu0 %v278
    %359 = vmatprep.mubr.f32.mxu0 0.0
    %360 = vmatmul.mubr.f32.gmra.mxu0 %v294
    %v361 = vpop.f32.mrf.mxu0
    %v362 = vadd.f32 0.0, %v361
    %v363 = vpop.f32.mrf.mxu0
    %v364 = vadd.f32 0.0, %v363
    %365 = vdwg.mxu0
    %v366 = vrot.slane %v362, 4
    %v367 = vmax.f32 %v362, %v366
    %v368 = vrot.slane %v367, 2
    %v369 = vmax.f32 %v367, %v368
    %v370 = vrot.slane %v369, 1
    %v371 = vmax.f32 %v369, %v370
    %v372 = vrot.slane %v364, 4
    %v373 = vmax.f32 %v364, %v372
    %v374 = vrot.slane %v373, 2
    %v375 = vmax.f32 %v373, %v374
    %v376 = vrot.slane %v375, 1
    %v377 = vmax.f32 %v375, %v376
    %v378 = vsub.f32 %v362, %v371
    %v379 = vsub.f32 %v364, %v377
    %v380 = vmul.f32 %v378, 1.442695
    %v381 = vpow.pop %v380
    %v382 = vmul.f32 %v379, 1.442695
    %v383 = vpow.pop %v382
    %v384 = vrot.slane %v381, 4
    %v385 = vadd.f32 %v381, %v384
    %v386 = vrot.slane %v385, 2
    %v387 = vadd.f32 %v385, %v386
    %v388 = vrot.slane %v387, 1
    %v389 = vadd.f32 %v387, %v388
    %v390 = vrot.slane %v383, 4
    %v391 = vadd.f32 %v383, %v390
    %v392 = vrot.slane %v391, 2
    %v393 = vadd.f32 %v391, %v392
    %v394 = vrot.slane %v393, 1
    %v395 = vadd.f32 %v393, %v394
    %v396 = vlog2.pop %v389
    %v397 = vmul.f32 %v396, 0.6931472
    %v398 = vlog2.pop %v395
    %v399 = vmul.f32 %v398, 0.6931472
    %v400 = vadd.f32 %v371, %v397
    %v401 = vadd.f32 %v377, %v399
    %s402 = smul.u32 0, 256
    %v403 = vlaneseq
    %v404 = vshrl.u32 %v403, 7
    %v405 = vlaneseq
    %v406 = vand.u32 %v405, 127
    %v407 = vadd.s32 %v406, 128
    %v408 = vstv %s402
    %v409 = vadd.s32 %v406, %v408
    %v410 = vadd.s32 %v407, %v408
    %vm411 = vcmp.eq.s32.totalorder %v404, %v409
    %vm412 = vcmp.eq.s32.totalorder %v404, %v410
    %v413 = vsel %vm411, %v362, -1e+30
    %v414 = vsel %vm412, %v364, -1e+30
    %v415 = vrot.slane %v413, 4
    %v416 = vmax.f32 %v413, %v415
    %v417 = vrot.slane %v416, 2
    %v418 = vmax.f32 %v416, %v417
    %v419 = vrot.slane %v418, 1
    %v420 = vmax.f32 %v418, %v419
    %v421 = vrot.slane %v414, 4
    %v422 = vmax.f32 %v414, %v421
    %v423 = vrot.slane %v422, 2
    %v424 = vmax.f32 %v422, %v423
    %v425 = vrot.slane %v424, 1
    %v426 = vmax.f32 %v424, %v425
    %v427 = vsub.f32 %v400, %v420
    %v428 = vsub.f32 %v401, %v426
    %v431 = vcombine.low %v427, %v428
    %v433 = vunpack.c.l.s4 1966171168
    %v434 = vunpack.c.0.s8 %v433
    %v435 = vlaneseq
    %v436 = vshrl.u32 %v435, 7
    %v437 = vsub.s32 %v434, %v436
    %v438 = vrot.slane %v431, %v437
    %v440 = vunpack.c.l.s4 1966171168
    %v441 = vunpack.c.0.s8 %v440
    %v442 = vlaneseq
    %v443 = vshrl.u32 %v442, 7
    %v444 = vsub.s32 %v441, %v443
    %v445 = vrot.slane %v438, %v444
    %v447 = vlaneseq
    %vm448 = vcmp.ge.s32.totalorder %v447, 0
    %vm449 = vcmp.lt.s32.totalorder %v447, 256
    %vm450 = vmand %vm448, %vm449
    %451 = vst.msk [vmem:[#allocation7] sm:$0x3] %vm450, %v445
    // Predicated region
    $region18: #{tpu_custom_call.1} parent=1 // pred_check
      _
    $region19: #{tpu_custom_call.1} parent=1 // pred_check_branch
      %453 = sbr.rel (0) target = $region21
    $region20: #{tpu_custom_call.1} parent=1 // pred_region
      %s455 = ssub.s32 32, 32
      %456 = vsyncadd [#allocation4], %s455
      %s458 = sshll.u32 [#allocation7], 4
      %s459 = int_to_ptr.vmem [resolvable:$true] %s458
      %461 = dma.vmem_to_hbm [thread:$0]  %s459, 32, %s2, [#allocation4]
    $region21: #{tpu_custom_call.1} parent=1 // pred_fallthru
      _
    // Predicated region
    $region22: #{tpu_custom_call.1} parent=1 // pred_check
      _
    $region23: #{tpu_custom_call.1} parent=1 // pred_check_branch
      %463 = sbr.rel (0) target = $region25
    $region24: #{tpu_custom_call.1} parent=1 // pred_region
      %464 = dma.done [#allocation4], 32
    $region25: #{tpu_custom_call.1} parent=1 // pred_fallthru
      _
    %465 = vsyncpa [#allocation3], 1
    %466 = vsyncpa [#allocation6], 1
    %467 = vsyncpa [#allocation4], 1

// kernel: tpu_custom_call.1
$region0: #{tpu_custom_call.1}
  #allocation0 [shape = 'u32[]', space=smem, size = 0x4, offset = 0x4, fixed_abs, tag = 'smem constant byte address 0x4 - core index']
  #allocation1 [shape = 'u32[144,128]{1,0:T(1,128)}', space=vmem, size = 0x12000, scoped, tag = 'internal scratch']
  %s0 = inlined_call_operand.hbm [shape: f32[256,128], index: 0, kind: input, shape index: {}]
  %s1 = inlined_call_operand.hbm [shape: f32[8,128], index: 1, kind: input, shape index: {}]
  %s2 = inlined_call_operand.hbm [shape: f32[1,256], index: 2, kind: output, shape index: {}]
  %s3 = sld [smem:[#allocation0]]
  $region26: #{tpu_custom_call.1} parent=0
    _
  %s5 = ssub.s32 1, %s3
  %s6 = scalar_select 0, %s5, %s3
  $region1: #{tpu_custom_call.1} parent=0
    #allocation2 [shape = 'u8[131072]{0}', space=vmem, size = 0x20000, scoped, tag = 'input window, operand 0, single buffered']
    #allocation3 [shape = 's32[1]{0}', space=sflag, size = 0x4, scoped, tag = 'scoped memory for tpu_custom_call.1']
    #allocation4 [shape = 's32[1]{0}', space=sflag, size = 0x4, scoped, tag = 'scoped memory for tpu_custom_call.1']
    #allocation5 [shape = 'u8[4096]{0}', space=vmem, size = 0x1000, scoped, tag = 'input window, operand 1, single buffered']
    #allocation6 [shape = 's32[1]{0}', space=sflag, size = 0x4, scoped, tag = 'scoped memory for tpu_custom_call.1']
    #allocation7 [shape = 'u8[1024]{0}', space=vmem, size = 0x400, scoped, tag = 'output window, operand 0, single buffered']
    %7 = vsyncpa [#allocation3], 0
    %8 = vsyncpa [#allocation6], 0
    %9 = vsyncpa [#allocation4], 0
    // Predicated region
    $region2: #{tpu_custom_call.1} parent=1 // pred_check
      _
    $region3: #{tpu_custom_call.1} parent=1 // pred_check_branch
      %11 = sbr.rel (0) target = $region5
    $region4: #{tpu_custom_call.1} parent=1 // pred_region
      %s13 = ssub.s32 4096, 4096
      %14 = vsyncadd [#allocation3], %s13
      %s15 = sshll.u32 [#allocation2], 4
      %s16 = int_to_ptr.vmem [resolvable:$true] %s15
      %21 = dma.hbm_to_vmem [thread:$0]  %s0, 4096, %s16, [#allocation3], 128, 128, 8
    $region5: #{tpu_custom_call.1} parent=1 // pred_fallthru
      _
    // Predicated region
    $region6: #{tpu_custom_call.1} parent=1 // pred_check
      _
    $region7: #{tpu_custom_call.1} parent=1 // pred_check_branch
      %23 = sbr.rel (0) target = $region9
    $region8: #{tpu_custom_call.1} parent=1 // pred_region
      %s25 = ssub.s32 128, 128
      %26 = vsyncadd [#allocation6], %s25
      %s28 = sshll.u32 [#allocation5], 4
      %s29 = int_to_ptr.vmem [resolvable:$true] %s28
      %31 = dma.hbm_to_vmem [thread:$0]  %s1, 128, %s29, [#allocation6]
    $region9: #{tpu_custom_call.1} parent=1 // pred_fallthru
      _
    // Predicated region
    $region10: #{tpu_custom_call.1} parent=1 // pred_check
      _
    $region11: #{tpu_custom_call.1} parent=1 // pred_check_branch
      %33 = sbr.rel (0) target = $region13
    $region12: #{tpu_custom_call.1} parent=1 // pred_region
      %34 = dma.done [#allocation3], 4096
    $region13: #{tpu_custom_call.1} parent=1 // pred_fallthru
      _
    // Predicated region
    $region14: #{tpu_custom_call.1} parent=1 // pred_check
      _
    $region15: #{tpu_custom_call.1} parent=1 // pred_check_branch
      %36 = sbr.rel (0) target = $region17
    $region16: #{tpu_custom_call.1} parent=1 // pred_region
      %37 = dma.done [#allocation6], 128
    $region17: #{tpu_custom_call.1} parent=1 // pred_fallthru
      _
    %v38 = vld [vmem:[#allocation2] sm:$0xff]
    %v39 = vld [vmem:[#allocation2 + $0x8] sm:$0xff]
    %v40 = vld [vmem:[#allocation2 + $0x10] sm:$0xff]
    %v41 = vld [vmem:[#allocation2 + $0x18] sm:$0xff]
    %v42 = vld [vmem:[#allocation2 + $0x20] sm:$0xff]
    %v43 = vld [vmem:[#allocation2 + $0x28] sm:$0xff]
    %v44 = vld [vmem:[#allocation2 + $0x30] sm:$0xff]
    %v45 = vld [vmem:[#allocation2 + $0x38] sm:$0xff]
    %v46 = vld [vmem:[#allocation2 + $0x40] sm:$0xff]
    %v47 = vld [vmem:[#allocation2 + $0x48] sm:$0xff]
    %v48 = vld [vmem:[#allocation2 + $0x50] sm:$0xff]
    %v49 = vld [vmem:[#allocation2 + $0x58] sm:$0xff]
    %v50 = vld [vmem:[#allocation2 + $0x60] sm:$0xff]
    %v51 = vld [vmem:[#allocation2 + $0x68] sm:$0xff]
    %v52 = vld [vmem:[#allocation2 + $0x70] sm:$0xff]
    %v53 = vld [vmem:[#allocation2 + $0x78] sm:$0xff]
    %v54 = vld [vmem:[#allocation2 + $0x80] sm:$0xff]
    %v55 = vld [vmem:[#allocation2 + $0x88] sm:$0xff]
    %v56 = vld [vmem:[#allocation2 + $0x90] sm:$0xff]
    %v57 = vld [vmem:[#allocation2 + $0x98] sm:$0xff]
    %v58 = vld [vmem:[#allocation2 + $0xa0] sm:$0xff]
    %v59 = vld [vmem:[#allocation2 + $0xa8] sm:$0xff]
    %v60 = vld [vmem:[#allocation2 + $0xb0] sm:$0xff]
    %v61 = vld [vmem:[#allocation2 + $0xb8] sm:$0xff]
    %v62 = vld [vmem:[#allocation2 + $0xc0] sm:$0xff]
    %v63 = vld [vmem:[#allocation2 + $0xc8] sm:$0xff]
    %v64 = vld [vmem:[#allocation2 + $0xd0] sm:$0xff]
    %v65 = vld [vmem:[#allocation2 + $0xd8] sm:$0xff]
    %v66 = vld [vmem:[#allocation2 + $0xe0] sm:$0xff]
    %v67 = vld [vmem:[#allocation2 + $0xe8] sm:$0xff]
    %v68 = vld [vmem:[#allocation2 + $0xf0] sm:$0xff]
    %v69 = vld [vmem:[#allocation2 + $0xf8] sm:$0xff]
    %v70 = vmul.f32 %v38, %v38
    %v71 = vmul.f32 %v39, %v39
    %v72 = vmul.f32 %v40, %v40
    %v73 = vmul.f32 %v41, %v41
    %v74 = vmul.f32 %v42, %v42
    %v75 = vmul.f32 %v43, %v43
    %v76 = vmul.f32 %v44, %v44
    %v77 = vmul.f32 %v45, %v45
    %v78 = vmul.f32 %v46, %v46
    %v79 = vmul.f32 %v47, %v47
    %v80 = vmul.f32 %v48, %v48
    %v81 = vmul.f32 %v49, %v49
    %v82 = vmul.f32 %v50, %v50
    %v83 = vmul.f32 %v51, %v51
    %v84 = vmul.f32 %v52, %v52
    %v85 = vmul.f32 %v53, %v53
    %v86 = vmul.f32 %v54, %v54
    %v87 = vmul.f32 %v55, %v55
    %v88 = vmul.f32 %v56, %v56
    %v89 = vmul.f32 %v57, %v57
    %v90 = vmul.f32 %v58, %v58
    %v91 = vmul.f32 %v59, %v59
    %v92 = vmul.f32 %v60, %v60
    %v93 = vmul.f32 %v61, %v61
    %v94 = vmul.f32 %v62, %v62
    %v95 = vmul.f32 %v63, %v63
    %v96 = vmul.f32 %v64, %v64
    %v97 = vmul.f32 %v65, %v65
    %v98 = vmul.f32 %v66, %v66
    %v99 = vmul.f32 %v67, %v67
    %v100 = vmul.f32 %v68, %v68
    %v101 = vmul.f32 %v69, %v69
    %102 = vadd.xlane.f32.xlu0 %v70
    %v103 = vpop.xlane.xlu0 %102
    %104 = vadd.xlane.f32.xlu0 %v71
    %v105 = vpop.xlane.xlu0 %104
    %106 = vadd.xlane.f32.xlu0 %v72
    %v107 = vpop.xlane.xlu0 %106
    %108 = vadd.xlane.f32.xlu0 %v73
    %v109 = vpop.xlane.xlu0 %108
    %110 = vadd.xlane.f32.xlu0 %v74
    %v111 = vpop.xlane.xlu0 %110
    %112 = vadd.xlane.f32.xlu0 %v75
    %v113 = vpop.xlane.xlu0 %112
    %114 = vadd.xlane.f32.xlu0 %v76
    %v115 = vpop.xlane.xlu0 %114
    %116 = vadd.xlane.f32.xlu0 %v77
    %v117 = vpop.xlane.xlu0 %116
    %118 = vadd.xlane.f32.xlu0 %v78
    %v119 = vpop.xlane.xlu0 %118
    %120 = vadd.xlane.f32.xlu0 %v79
    %v121 = vpop.xlane.xlu0 %120
    %122 = vadd.xlane.f32.xlu0 %v80
    %v123 = vpop.xlane.xlu0 %122
    %124 = vadd.xlane.f32.xlu0 %v81
    %v125 = vpop.xlane.xlu0 %124
    %126 = vadd.xlane.f32.xlu0 %v82
    %v127 = vpop.xlane.xlu0 %126
    %128 = vadd.xlane.f32.xlu0 %v83
    %v129 = vpop.xlane.xlu0 %128
    %130 = vadd.xlane.f32.xlu0 %v84
    %v131 = vpop.xlane.xlu0 %130
    %132 = vadd.xlane.f32.xlu0 %v85
    %v133 = vpop.xlane.xlu0 %132
    %134 = vadd.xlane.f32.xlu0 %v86
    %v135 = vpop.xlane.xlu0 %134
    %136 = vadd.xlane.f32.xlu0 %v87
    %v137 = vpop.xlane.xlu0 %136
    %138 = vadd.xlane.f32.xlu0 %v88
    %v139 = vpop.xlane.xlu0 %138
    %140 = vadd.xlane.f32.xlu0 %v89
    %v141 = vpop.xlane.xlu0 %140
    %142 = vadd.xlane.f32.xlu0 %v90
    %v143 = vpop.xlane.xlu0 %142
    %144 = vadd.xlane.f32.xlu0 %v91
    %v145 = vpop.xlane.xlu0 %144
    %146 = vadd.xlane.f32.xlu0 %v92
    %v147 = vpop.xlane.xlu0 %146
    %148 = vadd.xlane.f32.xlu0 %v93
    %v149 = vpop.xlane.xlu0 %148
    %150 = vadd.xlane.f32.xlu0 %v94
    %v151 = vpop.xlane.xlu0 %150
    %152 = vadd.xlane.f32.xlu0 %v95
    %v153 = vpop.xlane.xlu0 %152
    %154 = vadd.xlane.f32.xlu0 %v96
    %v155 = vpop.xlane.xlu0 %154
    %156 = vadd.xlane.f32.xlu0 %v97
    %v157 = vpop.xlane.xlu0 %156
    %158 = vadd.xlane.f32.xlu0 %v98
    %v159 = vpop.xlane.xlu0 %158
    %160 = vadd.xlane.f32.xlu0 %v99
    %v161 = vpop.xlane.xlu0 %160
    %162 = vadd.xlane.f32.xlu0 %v100
    %v163 = vpop.xlane.xlu0 %162
    %164 = vadd.xlane.f32.xlu0 %v101
    %v165 = vpop.xlane.xlu0 %164
    %v166 = vmax.f32 %v103, 1e-16
    %v167 = vmax.f32 %v105, 1e-16
    %v168 = vmax.f32 %v107, 1e-16
    %v169 = vmax.f32 %v109, 1e-16
    %v170 = vmax.f32 %v111, 1e-16
    %v171 = vmax.f32 %v113, 1e-16
    %v172 = vmax.f32 %v115, 1e-16
    %v173 = vmax.f32 %v117, 1e-16
    %v174 = vmax.f32 %v119, 1e-16
    %v175 = vmax.f32 %v121, 1e-16
    %v176 = vmax.f32 %v123, 1e-16
    %v177 = vmax.f32 %v125, 1e-16
    %v178 = vmax.f32 %v127, 1e-16
    %v179 = vmax.f32 %v129, 1e-16
    %v180 = vmax.f32 %v131, 1e-16
    %v181 = vmax.f32 %v133, 1e-16
    %v182 = vmax.f32 %v135, 1e-16
    %v183 = vmax.f32 %v137, 1e-16
    %v184 = vmax.f32 %v139, 1e-16
    %v185 = vmax.f32 %v141, 1e-16
    %v186 = vmax.f32 %v143, 1e-16
    %v187 = vmax.f32 %v145, 1e-16
    %v188 = vmax.f32 %v147, 1e-16
    %v189 = vmax.f32 %v149, 1e-16
    %v190 = vmax.f32 %v151, 1e-16
    %v191 = vmax.f32 %v153, 1e-16
    %v192 = vmax.f32 %v155, 1e-16
    %v193 = vmax.f32 %v157, 1e-16
    %v194 = vmax.f32 %v159, 1e-16
    %v195 = vmax.f32 %v161, 1e-16
    %v196 = vmax.f32 %v163, 1e-16
    %v197 = vmax.f32 %v165, 1e-16
    %v198 = vrsqrt.pop %v166
    %v199 = vrsqrt.pop %v167
    %v200 = vrsqrt.pop %v168
    %v201 = vrsqrt.pop %v169
    %v202 = vrsqrt.pop %v170
    %v203 = vrsqrt.pop %v171
    %v204 = vrsqrt.pop %v172
    %v205 = vrsqrt.pop %v173
    %v206 = vrsqrt.pop %v174
    %v207 = vrsqrt.pop %v175
    %v208 = vrsqrt.pop %v176
    %v209 = vrsqrt.pop %v177
    %v210 = vrsqrt.pop %v178
    %v211 = vrsqrt.pop %v179
    %v212 = vrsqrt.pop %v180
    %v213 = vrsqrt.pop %v181
    %v214 = vrsqrt.pop %v182
    %v215 = vrsqrt.pop %v183
    %v216 = vrsqrt.pop %v184
    %v217 = vrsqrt.pop %v185
    %v218 = vrsqrt.pop %v186
    %v219 = vrsqrt.pop %v187
    %v220 = vrsqrt.pop %v188
    %v221 = vrsqrt.pop %v189
    %v222 = vrsqrt.pop %v190
    %v223 = vrsqrt.pop %v191
    %v224 = vrsqrt.pop %v192
    %v225 = vrsqrt.pop %v193
    %v226 = vrsqrt.pop %v194
    %v227 = vrsqrt.pop %v195
    %v228 = vrsqrt.pop %v196
    %v229 = vrsqrt.pop %v197
    %v230 = vmul.f32 %v198, 2.0
    %v231 = vmul.f32 %v199, 2.0
    %v232 = vmul.f32 %v200, 2.0
    %v233 = vmul.f32 %v201, 2.0
    %v234 = vmul.f32 %v202, 2.0
    %v235 = vmul.f32 %v203, 2.0
    %v236 = vmul.f32 %v204, 2.0
    %v237 = vmul.f32 %v205, 2.0
    %v238 = vmul.f32 %v206, 2.0
    %v239 = vmul.f32 %v207, 2.0
    %v240 = vmul.f32 %v208, 2.0
    %v241 = vmul.f32 %v209, 2.0
    %v242 = vmul.f32 %v210, 2.0
    %v243 = vmul.f32 %v211, 2.0
    %v244 = vmul.f32 %v212, 2.0
    %v245 = vmul.f32 %v213, 2.0
    %v246 = vmul.f32 %v214, 2.0
    %v247 = vmul.f32 %v215, 2.0
    %v248 = vmul.f32 %v216, 2.0
    %v249 = vmul.f32 %v217, 2.0
    %v250 = vmul.f32 %v218, 2.0
    %v251 = vmul.f32 %v219, 2.0
    %v252 = vmul.f32 %v220, 2.0
    %v253 = vmul.f32 %v221, 2.0
    %v254 = vmul.f32 %v222, 2.0
    %v255 = vmul.f32 %v223, 2.0
    %v256 = vmul.f32 %v224, 2.0
    %v257 = vmul.f32 %v225, 2.0
    %v258 = vmul.f32 %v226, 2.0
    %v259 = vmul.f32 %v227, 2.0
    %v260 = vmul.f32 %v228, 2.0
    %v261 = vmul.f32 %v229, 2.0
    %v262 = vmul.f32 %v38, %v230
    %v263 = vmul.f32 %v39, %v231
    %v264 = vmul.f32 %v40, %v232
    %v265 = vmul.f32 %v41, %v233
    %v266 = vmul.f32 %v42, %v234
    %v267 = vmul.f32 %v43, %v235
    %v268 = vmul.f32 %v44, %v236
    %v269 = vmul.f32 %v45, %v237
    %v270 = vmul.f32 %v46, %v238
    %v271 = vmul.f32 %v47, %v239
    %v272 = vmul.f32 %v48, %v240
    %v273 = vmul.f32 %v49, %v241
    %v274 = vmul.f32 %v50, %v242
    %v275 = vmul.f32 %v51, %v243
    %v276 = vmul.f32 %v52, %v244
    %v277 = vmul.f32 %v53, %v245
    %v278 = vmul.f32 %v54, %v246
    %v279 = vmul.f32 %v55, %v247
    %v280 = vmul.f32 %v56, %v248
    %v281 = vmul.f32 %v57, %v249
    %v282 = vmul.f32 %v58, %v250
    %v283 = vmul.f32 %v59, %v251
    %v284 = vmul.f32 %v60, %v252
    %v285 = vmul.f32 %v61, %v253
    %v286 = vmul.f32 %v62, %v254
    %v287 = vmul.f32 %v63, %v255
    %v288 = vmul.f32 %v64, %v256
    %v289 = vmul.f32 %v65, %v257
    %v290 = vmul.f32 %v66, %v258
    %v291 = vmul.f32 %v67, %v259
    %v292 = vmul.f32 %v68, %v260
    %v293 = vmul.f32 %v69, %v261
    %v294 = vld [vmem:[#allocation5] sm:$0xff]
    %295 = vmatprep.subr.mxu0 0.0
    %296 = vmatpush1.xpose.msra.mxu0 %v277
    %297 = vmatprep.subr.mxu0 0.0
    %298 = vmatpush1.xpose.msra.mxu0 %v276
    %299 = vmatprep.subr.mxu0 0.0
    %300 = vmatpush1.xpose.msra.mxu0 %v275
    %301 = vmatprep.subr.mxu0 0.0
    %302 = vmatpush1.xpose.msra.mxu0 %v274
    %303 = vmatprep.subr.mxu0 0.0
    %304 = vmatpush1.xpose.msra.mxu0 %v273
    %305 = vmatprep.subr.mxu0 0.0
    %306 = vmatpush1.xpose.msra.mxu0 %v272
    %307 = vmatprep.subr.mxu0 0.0
    %308 = vmatpush1.xpose.msra.mxu0 %v271
    %309 = vmatprep.subr.mxu0 0.0
    %310 = vmatpush1.xpose.msra.mxu0 %v270
    %311 = vmatprep.subr.mxu0 0.0
    %312 = vmatpush1.xpose.msra.mxu0 %v269
    %313 = vmatprep.subr.mxu0 0.0
    %314 = vmatpush1.xpose.msra.mxu0 %v268
    %315 = vmatprep.subr.mxu0 0.0
    %316 = vmatpush1.xpose.msra.mxu0 %v267
    %317 = vmatprep.subr.mxu0 0.0
    %318 = vmatpush1.xpose.msra.mxu0 %v266
    %319 = vmatprep.subr.mxu0 0.0
    %320 = vmatpush1.xpose.msra.mxu0 %v265
    %321 = vmatprep.subr.mxu0 0.0
    %322 = vmatpush1.xpose.msra.mxu0 %v264
    %323 = vmatprep.subr.mxu0 0.0
    %324 = vmatpush1.xpose.msra.mxu0 %v263
    %325 = vmatprep.subr.mxu0 0.0
    %326 = vmatpush1.xpose.msra.mxu0 %v262
    %327 = vmatprep.subr.mxu0 0.0
    %328 = vmatpush2.xpose.msra.mxu0 %v293
    %329 = vmatprep.subr.mxu0 0.0
    %330 = vmatpush2.xpose.msra.mxu0 %v292
    %331 = vmatprep.subr.mxu0 0.0
    %332 = vmatpush2.xpose.msra.mxu0 %v291
    %333 = vmatprep.subr.mxu0 0.0
    %334 = vmatpush2.xpose.msra.mxu0 %v290
    %335 = vmatprep.subr.mxu0 0.0
    %336 = vmatpush2.xpose.msra.mxu0 %v289
    %337 = vmatprep.subr.mxu0 0.0
    %338 = vmatpush2.xpose.msra.mxu0 %v288
    %339 = vmatprep.subr.mxu0 0.0
    %340 = vmatpush2.xpose.msra.mxu0 %v287
    %341 = vmatprep.subr.mxu0 0.0
    %342 = vmatpush2.xpose.msra.mxu0 %v286
    %343 = vmatprep.subr.mxu0 0.0
    %344 = vmatpush2.xpose.msra.mxu0 %v285
    %345 = vmatprep.subr.mxu0 0.0
    %346 = vmatpush2.xpose.msra.mxu0 %v284
    %347 = vmatprep.subr.mxu0 0.0
    %348 = vmatpush2.xpose.msra.mxu0 %v283
    %349 = vmatprep.subr.mxu0 0.0
    %350 = vmatpush2.xpose.msra.mxu0 %v282
    %351 = vmatprep.subr.mxu0 0.0
    %352 = vmatpush2.xpose.msra.mxu0 %v281
    %353 = vmatprep.subr.mxu0 0.0
    %354 = vmatpush2.xpose.msra.mxu0 %v280
    %355 = vmatprep.subr.mxu0 0.0
    %356 = vmatpush2.xpose.msra.mxu0 %v279
    %357 = vmatprep.subr.mxu0 0.0
    %358 = vmatpush2.xpose.msra.mxu0 %v278
    %359 = vmatprep.mubr.f32.mxu0 0.0
    %360 = vmatmul.mubr.f32.gmra.mxu0 %v294
    %v361 = vpop.f32.mrf.mxu0
    %v362 = vadd.f32 0.0, %v361
    %v363 = vpop.f32.mrf.mxu0
    %v364 = vadd.f32 0.0, %v363
    %365 = vdwg.mxu0
    %v366 = vrot.slane %v362, 4
    %v367 = vmax.f32 %v362, %v366
    %v368 = vrot.slane %v367, 2
    %v369 = vmax.f32 %v367, %v368
    %v370 = vrot.slane %v369, 1
    %v371 = vmax.f32 %v369, %v370
    %v372 = vrot.slane %v364, 4
    %v373 = vmax.f32 %v364, %v372
    %v374 = vrot.slane %v373, 2
    %v375 = vmax.f32 %v373, %v374
    %v376 = vrot.slane %v375, 1
    %v377 = vmax.f32 %v375, %v376
    %v378 = vsub.f32 %v362, %v371
    %v379 = vsub.f32 %v364, %v377
    %v380 = vmul.f32 %v378, 1.442695
    %v381 = vpow.pop %v380
    %v382 = vmul.f32 %v379, 1.442695
    %v383 = vpow.pop %v382
    %v384 = vrot.slane %v381, 4
    %v385 = vadd.f32 %v381, %v384
    %v386 = vrot.slane %v385, 2
    %v387 = vadd.f32 %v385, %v386
    %v388 = vrot.slane %v387, 1
    %v389 = vadd.f32 %v387, %v388
    %v390 = vrot.slane %v383, 4
    %v391 = vadd.f32 %v383, %v390
    %v392 = vrot.slane %v391, 2
    %v393 = vadd.f32 %v391, %v392
    %v394 = vrot.slane %v393, 1
    %v395 = vadd.f32 %v393, %v394
    %v396 = vlog2.pop %v389
    %v397 = vmul.f32 %v396, 0.6931472
    %v398 = vlog2.pop %v395
    %v399 = vmul.f32 %v398, 0.6931472
    %v400 = vadd.f32 %v371, %v397
    %v401 = vadd.f32 %v377, %v399
    %s402 = smul.u32 0, 256
    %v403 = vlaneseq
    %v404 = vshrl.u32 %v403, 7
    %v405 = vlaneseq
    %v406 = vand.u32 %v405, 127
    %v407 = vadd.s32 %v406, 128
    %v408 = vstv %s402
    %v409 = vadd.s32 %v406, %v408
    %v410 = vadd.s32 %v407, %v408
    %vm411 = vcmp.eq.s32.totalorder %v404, %v409
    %vm412 = vcmp.eq.s32.totalorder %v404, %v410
    %v413 = vsel %vm411, %v362, -1e+30
    %v414 = vsel %vm412, %v364, -1e+30
    %v415 = vrot.slane %v413, 4
    %v416 = vmax.f32 %v413, %v415
    %v417 = vrot.slane %v416, 2
    %v418 = vmax.f32 %v416, %v417
    %v419 = vrot.slane %v418, 1
    %v420 = vmax.f32 %v418, %v419
    %v421 = vrot.slane %v414, 4
    %v422 = vmax.f32 %v414, %v421
    %v423 = vrot.slane %v422, 2
    %v424 = vmax.f32 %v422, %v423
    %v425 = vrot.slane %v424, 1
    %v426 = vmax.f32 %v424, %v425
    %v427 = vsub.f32 %v400, %v420
    %v428 = vsub.f32 %v401, %v426
    %v431 = vcombine.low %v427, %v428
    %v433 = vunpack.c.l.s4 1966171168
    %v434 = vunpack.c.0.s8 %v433
    %v435 = vlaneseq
    %v436 = vshrl.u32 %v435, 7
    %v437 = vsub.s32 %v434, %v436
    %v438 = vrot.slane %v431, %v437
    %v440 = vunpack.c.l.s4 1966171168
    %v441 = vunpack.c.0.s8 %v440
    %v442 = vlaneseq
    %v443 = vshrl.u32 %v442, 7
    %v444 = vsub.s32 %v441, %v443
    %v445 = vrot.slane %v438, %v444
    %v447 = vlaneseq
    %vm448 = vcmp.ge.s32.totalorder %v447, 0
    %vm449 = vcmp.lt.s32.totalorder %v447, 256
    %vm450 = vmand %vm448, %vm449
    %451 = vst.msk [vmem:[#allocation7] sm:$0x3] %vm450, %v445
    // Predicated region
    $region18: #{tpu_custom_call.1} parent=1 // pred_check
      _
    $region19: #{tpu_custom_call.1} parent=1 // pred_check_branch
      %453 = sbr.rel (0) target = $region21
    $region20: #{tpu_custom_call.1} parent=1 // pred_region
      %s455 = ssub.s32 32, 32
      %456 = vsyncadd [#allocation4], %s455
      %s458 = sshll.u32 [#allocation7], 4
      %s459 = int_to_ptr.vmem [resolvable:$true] %s458
      %461 = dma.vmem_to_hbm [thread:$0]  %s459, 32, %s2, [#allocation4]
    $region21: #{tpu_custom_call.1} parent=1 // pred_fallthru
      _
    // Predicated region
    $region22: #{tpu_custom_call.1} parent=1 // pred_check
      _
    $region23: #{tpu_custom_call.1} parent=1 // pred_check_branch
      %463 = sbr.rel (0) target = $region25
    $region24: #{tpu_custom_call.1} parent=1 // pred_region
      %464 = dma.done [#allocation4], 32
    $region25: #{tpu_custom_call.1} parent=1 // pred_fallthru
      _
    %465 = vsyncpa [#allocation3], 1
    %466 = vsyncpa [#allocation6], 1
    %467 = vsyncpa [#allocation4], 1

</llo_original>
